<compile_context>
chip_gen: v6e
topology: v6e:2x2x1
jax: 0.10.0
libtpu: 0.0.40
codegen_flags: <defaults>
</compile_context>

<pallas_src>
import jax
import jax.numpy as jnp
from jax.experimental import pallas as pl
from jax.experimental.pallas import tpu as pltpu


def _round_down_mult(x, m):
    return (x // m) * m


def _physical_vmem_bytes():
    """Best-effort physical VMEM size (v7x: 64 MiB, v5e/v6e: 128 MiB)."""
    try:
        return int(pltpu.get_tpu_info().vmem_capacity_bytes)
    except Exception:
        pass
    try:
        kind = jax.devices()[0].device_kind.lower()
        if "v5" in kind or "v6" in kind:
            return 128 * 1024 * 1024
    except Exception:
        pass
    return 64 * 1024 * 1024  # conservative (v7x-sized) default


def _choose_k_tile(c_in, max_k_tile):
    """Return (t_k, c_in_padded) with t_k | c_in_padded and t_k a legal block dim."""
    if c_in <= max_k_tile:
        return c_in, c_in                       # full extent, no tiling
    # exact 128-multiple divisor: no padding needed
    for cand in range(max_k_tile, 127, -128):
        if c_in % cand == 0:
            return cand, c_in
    # no divisor: zero-pad C_in to a 128-multiple and take its largest
    # 128-multiple divisor <= max_k_tile (keeps K tiling, keeps t_t wide).
    c_pad = ((c_in + 127) // 128) * 128
    for cand in range(max_k_tile, 127, -128):
        if c_pad % cand == 0:
            return cand, c_pad
    return 128, c_pad


def _pick_time_tile(t_co, t_k, n_time, x_item, w_item, out_item,
                    use_scratch, vmem_bytes):
    """Widest 128-multiple time tile that fits the VMEM budget."""
    budget = (38 << 20) if vmem_bytes <= (64 << 20) else (48 << 20)
    fixed = 2 * t_co * t_k * w_item + 2 * t_co * 4          # dbl-buffered W + bias
    per_t = 2 * t_k * x_item + 2 * t_co * out_item          # dbl-buffered x + out
    if use_scratch:
        per_t += t_co * 4                                   # f32 accumulator
    t_t = (budget - fixed) // max(per_t, 1)
    t_t = max(128, min(2048, _round_down_mult(int(t_t), 128)))
    if n_time <= t_t:
        t_t = n_time                                        # full extent is legal
    return t_t


def _make_pw_kernel(has_bias, mode, cast_x, k_axis):
    """Kernel body for the (bias?, accumulation-mode, bf16-x-cast?) variant.

    mode: "direct"      — whole contraction in one step, write output tile.
          "acc_out"     — K-tiled, f32 output: accumulate into resident o_ref.
          "acc_scratch" — K-tiled, non-f32 output: f32 VMEM acc, cast at last k.
    """

    def _mm(x_ref, w_ref):
        x = x_ref[0]                       # (t_k, t_t)
        if cast_x is not None:
            x = x.astype(cast_x)           # per-step cast of x only; W cast once
        return jnp.dot(w_ref[...], x, preferred_element_type=jnp.float32)

    if mode == "direct":
        if has_bias:
            def kernel(x_ref, w_ref, b_ref, o_ref):
                o_ref[0] = (_mm(x_ref, w_ref) + b_ref[...]).astype(o_ref.dtype)
        else:
            def kernel(x_ref, w_ref, o_ref):
                o_ref[0] = _mm(x_ref, w_ref).astype(o_ref.dtype)
        return kernel

    if mode == "acc_out":
        # Output block index is independent of k => tile resident across the
        # K loop; accumulate in place (no scratch, no finalize copy).
        if has_bias:
            def kernel(x_ref, w_ref, b_ref, o_ref):
                k = pl.program_id(k_axis)
                mm = _mm(x_ref, w_ref)

                @pl.when(k == 0)
                def _():
                    o_ref[0] = mm + b_ref[...]

                @pl.when(k > 0)
                def _():
                    o_ref[0] += mm
        else:
            def kernel(x_ref, w_ref, o_ref):
                k = pl.program_id(k_axis)
                mm = _mm(x_ref, w_ref)

                @pl.when(k == 0)
                def _():
                    o_ref[0] = mm

                @pl.when(k > 0)
                def _():
                    o_ref[0] += mm
        return kernel

    # mode == "acc_scratch": f32 VMEM accumulator, cast-store on the last k.
    if has_bias:
        def kernel(x_ref, w_ref, b_ref, o_ref, acc_ref):
            k = pl.program_id(k_axis)
            mm = _mm(x_ref, w_ref)

            @pl.when(k == 0)
            def _():
                acc_ref[...] = mm + b_ref[...]

            @pl.when(k > 0)
            def _():
                acc_ref[...] += mm

            @pl.when(k == pl.num_programs(k_axis) - 1)
            def _():
                o_ref[0] = acc_ref[...].astype(o_ref.dtype)
    else:
        def kernel(x_ref, w_ref, o_ref, acc_ref):
            k = pl.program_id(k_axis)
            mm = _mm(x_ref, w_ref)

            @pl.when(k == 0)
            def _():
                acc_ref[...] = mm

            @pl.when(k > 0)
            def _():
                acc_ref[...] += mm

            @pl.when(k == pl.num_programs(k_axis) - 1)
            def _():
                o_ref[0] = acc_ref[...].astype(o_ref.dtype)
    return kernel


def pointwise_conv1d(x, weight, bias=None, *, stride=1, padding=0,
                     allow_bf16_mxu=False, max_k_tile=2048):
    """Pointwise (kernel_size=1) 1-D convolution.

    Args:
      x:      (B, C_in, T)
      weight: (C_out, C_in, 1)   -- PyTorch Conv1d weight shape for k=1
      bias:   (C_out,) or None
      stride, padding: ints, same semantics as nn.Conv1d.
      allow_bf16_mxu: OPT-IN bf16 MXU inputs (f32 accumulation) when both
        channel dims are >= 256; exact f32 otherwise.
      max_k_tile: max C_in tile (multiple of 128); mainly for testing K tiling.

    Returns:
      (B, C_out, T_out) with T_out = floor((T + 2*padding - 1)/stride) + 1
    """
    B, C_in, T = x.shape
    C_out = weight.shape[0]

    # Stride / padding glue: only active when explicitly requested.
    if padding > 0:
        x = jnp.pad(x, ((0, 0), (0, 0), (padding, padding)))
    if stride > 1:
        x = x[:, :, ::stride]
    T_out = x.shape[2]

    w2d = weight.reshape(C_out, C_in)
    has_bias = bias is not None
    out_dtype = x.dtype

    # --- optional bf16 MXU path (opt-in): cast W once in the wrapper --------
    mxu_cast_x = None
    if (allow_bf16_mxu and C_in >= 256 and C_out >= 256
            and w2d.dtype == jnp.float32
            and (x.dtype == jnp.float32 or x.dtype == jnp.bfloat16)):
        w2d = w2d.astype(jnp.bfloat16)          # halves weight DMA bytes
        if x.dtype != jnp.bfloat16:
            mxu_cast_x = jnp.bfloat16           # per-step VMEM cast of x only

    # --- C_in (contraction) tiling, with zero-pad fallback -------------------
    max_k_tile = max(128, _round_down_mult(int(max_k_tile), 128))
    t_k, c_in_pad = _choose_k_tile(C_in, max_k_tile)
    if c_in_pad != C_in:
        x = jnp.pad(x, ((0, 0), (0, c_in_pad - C_in), (0, 0)))
        w2d = jnp.pad(w2d, ((0, 0), (0, c_in_pad - C_in)))
    n_k = c_in_pad // t_k

    # --- fold small-T multi-batch inputs to a lane-dense (1, C_in, B*T) slab -
    fold = (B > 1) and (T_out < 128)
    if fold:
        x = jnp.transpose(x, (1, 0, 2)).reshape(1, c_in_pad, B * T_out)
    B_k = 1 if fold else B
    n_time = B * T_out if fold else T_out

    # --- tile sizes -----------------------------------------------------------
    t_co = C_out if C_out <= 256 else 256
    vmem_bytes = _physical_vmem_bytes()
    x_item = jnp.dtype(x.dtype).itemsize
    w_item = jnp.dtype(w2d.dtype).itemsize
    out_item = jnp.dtype(out_dtype).itemsize

    if n_k == 1:
        mode = "direct"
    elif jnp.dtype(out_dtype) == jnp.dtype(jnp.float32):
        mode = "acc_out"        # accumulate into the resident output block
    else:
        mode = "acc_scratch"    # f32 VMEM accumulator, cast on last k

    t_t = _pick_time_tile(t_co, t_k, n_time, x_item, w_item, out_item,
                          mode == "acc_scratch", vmem_bytes)
    n_t = pl.cdiv(n_time, t_t)
    n_co = pl.cdiv(C_out, t_co)

    # --- grid & specs: x tile resident across the C_out loop; K axis last ----
    if B_k == 1:
        grid = (n_t, n_co, n_k)
        k_axis = 2
        x_map = lambda t, co, k: (0, k, t)
        w_map = lambda t, co, k: (co, k)
        b_map = lambda t, co, k: (co, 0)
        o_map = lambda t, co, k: (0, co, t)
        semantics = ("parallel", "parallel", "arbitrary")
    else:
        grid = (B_k, n_t, n_co, n_k)
        k_axis = 3
        x_map = lambda b, t, co, k: (b, k, t)
        w_map = lambda b, t, co, k: (co, k)
        b_map = lambda b, t, co, k: (co, 0)
        o_map = lambda b, t, co, k: (b, co, t)
        semantics = ("parallel", "parallel", "parallel", "arbitrary")

    kernel = _make_pw_kernel(has_bias, mode, mxu_cast_x, k_axis)

    in_specs = [
        pl.BlockSpec((1, t_k, t_t), x_map),
        pl.BlockSpec((t_co, t_k), w_map),
    ]
    inputs = [x, w2d]
    if has_bias:
        # Bias stays f32 and is added to the f32 accumulator inside the kernel.
        in_specs.append(pl.BlockSpec((t_co, 1), b_map))
        inputs.append(bias.astype(jnp.float32).reshape(C_out, 1))

    out_specs = pl.BlockSpec((1, t_co, t_t), o_map)
    scratch_shapes = ([pltpu.VMEM((t_co, t_t), jnp.float32)]
                      if mode == "acc_scratch" else [])

    # Explicit VMEM limit: double-buffered tiles + accumulator + slack,
    # never more than 3/4 of the chip's physical VMEM.
    est = (2 * (t_k * t_t * x_item + t_co * t_t * out_item
                + t_co * t_k * w_item + t_co * 4)
           + (t_co * t_t * 4 if mode == "acc_scratch" else 0)
           + (4 << 20))
    vmem_limit = int(min(vmem_bytes * 3 // 4, max(est, 32 << 20)))

    grid_spec = pltpu.PrefetchScalarGridSpec(
        num_scalar_prefetch=0,
        grid=grid,
        in_specs=in_specs,
        out_specs=out_specs,
        scratch_shapes=scratch_shapes,
    )

    out = pl.pallas_call(
        kernel,
        out_shape=jax.ShapeDtypeStruct((B_k, C_out, n_time), out_dtype),
        grid_spec=grid_spec,
        compiler_params=pltpu.CompilerParams(
            dimension_semantics=semantics,
            vmem_limit_bytes=vmem_limit,
        ),
    )(*inputs)

    if fold:
        out = jnp.transpose(out.reshape(C_out, B, T_out), (1, 0, 2))
    return out


if __name__ == "__main__":
    key = jax.random.PRNGKey(0)
    k_x, k_w, k_b, k_x2, k_w2, k_x3 = jax.random.split(key, 6)

    # --- Test 1: module-sized shapes (exercises the (C_in, B*T) fold path) ---
    B, C_in, C_out, T = 2, 4, 8, 16
    x = jax.random.normal(k_x, (B, C_in, T), dtype=jnp.float32)
    bound = 1.0 / (C_in ** 0.5)
    weight = jax.random.uniform(
        k_w, (C_out, C_in, 1), dtype=jnp.float32, minval=-bound, maxval=bound)
    bias = jax.random.uniform(
        k_b, (C_out,), dtype=jnp.float32, minval=-bound, maxval=bound)

    out = jax.block_until_ready(pointwise_conv1d(x, weight, bias))
    ref = jnp.einsum("oc,bct->bot", weight[:, :, 0], x) + bias[None, :, None]
    assert out.shape == (B, C_out, T)
    assert jnp.allclose(out, ref, atol=1e-5, rtol=1e-5)

    # --- Test 2: stride / padding glue (checked against XLA's conv) ----------
    out2 = jax.block_until_ready(pointwise_conv1d(x, weight, bias, stride=2, padding=1))
    ref2 = jax.lax.conv_general_dilated(
        x, weight, window_strides=(2,), padding=[(1, 1)],
        dimension_numbers=("NCH", "OIH", "NCH"),
    ) + bias[None, :, None]
    assert out2.shape == ref2.shape
    assert jnp.allclose(out2, ref2, atol=1e-5, rtol=1e-5)

    # --- Test 3: no-bias path (skips the bias DMA entirely) ------------------
    out3 = jax.block_until_ready(pointwise_conv1d(x, weight, None))
    ref3 = jnp.einsum("oc,bct->bot", weight[:, :, 0], x)
    assert jnp.allclose(out3, ref3, atol=1e-5, rtol=1e-5)

    # --- Test 4: B == 1, lane-dense T (batch-free grid, non-fold path) -------
    B4, C4i, C4o, T4 = 1, 8, 16, 256
    x4 = jax.random.normal(k_x2, (B4, C4i, T4), dtype=jnp.float32)
    w4 = 0.1 * jax.random.normal(k_w2, (C4o, C4i, 1), dtype=jnp.float32)
    out4 = jax.block_until_ready(pointwise_conv1d(x4, w4, None))
    ref4 = jnp.einsum("oc,bct->bot", w4[:, :, 0], x4)
    assert jnp.allclose(out4, ref4, atol=1e-5, rtol=1e-5)

    # --- Test 5: K-tiled accumulate-into-output path (forced small t_k) ------
    B5, C5i, C5o, T5 = 2, 256, 32, 128
    x5 = jax.random.normal(k_x3, (B5, C5i, T5), dtype=jnp.float32)
    w5 = jax.random.normal(k_w, (C5o, C5i, 1), dtype=jnp.float32) / (C5i ** 0.5)
    out5 = jax.block_until_ready(pointwise_conv1d(x5, w5, None, max_k_tile=128))
    ref5 = jnp.einsum("oc,bct->bot", w5[:, :, 0], x5)
    assert jnp.allclose(out5, ref5, atol=1e-4, rtol=1e-4)

    print("KERNEL_OK")
</pallas_src>

<mosaic_0001>
module attributes {stable_mosaic.version = 11 : i64} {
  func.func @kernel(%arg0: i32, %arg1: i32, %arg2: i32, %arg3: memref<1x4x32xf32, #tpu.memory_space<vmem>>, %arg4: memref<8x4xf32, #tpu.memory_space<vmem>>, %arg5: memref<8x1xf32, #tpu.memory_space<vmem>>, %arg6: memref<1x8x32xf32, #tpu.memory_space<vmem>>) attributes {dimension_semantics = [#tpu.dimension_semantics<parallel>, #tpu.dimension_semantics<parallel>, #tpu.dimension_semantics<arbitrary>], iteration_bounds = array<i64: 1, 1, 1>, scalar_prefetch = 0 : i64, scratch_operands = 0 : i64, tpu.core_type = #tpu.core_type<tc>, window_params = [{transform_indices = @transform_0, window_bounds = array<i64: 1, 4, 32>}, {transform_indices = @transform_1, window_bounds = array<i64: 8, 4>}, {transform_indices = @transform_2, window_bounds = array<i64: 8, 1>}, {transform_indices = @transform_3, window_bounds = array<i64: 1, 8, 32>}]} {
    %c0 = arith.constant 0 : index
    %c0_0 = arith.constant 0 : index
    %c0_1 = arith.constant 0 : index
    %0 = vector.load %arg3[%c0, %c0_0, %c0_1] : memref<1x4x32xf32, #tpu.memory_space<vmem>>, vector<1x4x32xf32>
    %1 = vector.shape_cast %0 : vector<1x4x32xf32> to vector<4x32xf32>
    %c0_2 = arith.constant 0 : index
    %c0_3 = arith.constant 0 : index
    %2 = vector.load %arg4[%c0_2, %c0_3] : memref<8x4xf32, #tpu.memory_space<vmem>>, vector<8x4xf32>
    %cst = arith.constant dense<0.000000e+00> : vector<8x32xf32>
    %3 = tpu.matmul %2, %1, %cst {dimension_numbers = #tpu.dot_dimension_numbers<[1], [0], [0], [1], [0, 0, 1, 1], [], []>} : vector<8x4xf32>, vector<4x32xf32>, vector<8x32xf32> -> vector<8x32xf32>
    %c0_4 = arith.constant 0 : index
    %c0_5 = arith.constant 0 : index
    %4 = vector.load %arg5[%c0_4, %c0_5] : memref<8x1xf32, #tpu.memory_space<vmem>>, vector<8x1xf32>
    %5 = vector.broadcast %4 : vector<8x1xf32> to vector<8x32xf32>
    %6 = arith.addf %3, %5 : vector<8x32xf32>
    %c0_6 = arith.constant 0 : index
    %c0_7 = arith.constant 0 : index
    %c0_8 = arith.constant 0 : index
    %7 = vector.load %arg6[%c0_6, %c0_7, %c0_8] : memref<1x8x32xf32, #tpu.memory_space<vmem>>, vector<1x8x32xf32>
    %8 = vector.shape_cast %7 : vector<1x8x32xf32> to vector<8x32xf32>
    %9 = vector.shape_cast %6 : vector<8x32xf32> to vector<1x8x32xf32>
    tpu.vector_store %arg6[%c0_6, %c0_7, %c0_8], %9 {strides = array<i32>} : memref<1x8x32xf32, #tpu.memory_space<vmem>>, vector<1x8x32xf32>,
    return
  }
  func.func @transform_0(%arg0: i32, %arg1: i32, %arg2: i32) -> (i32, i32, i32) {
    %c0_i32 = arith.constant 0 : i32
    %c0_i32_0 = arith.constant 0 : i32
    return %c0_i32, %arg2, %arg0 : i32, i32, i32
  }
  func.func @transform_1(%arg0: i32, %arg1: i32, %arg2: i32) -> (i32, i32) {
    %c0_i32 = arith.constant 0 : i32
    return %arg1, %arg2 : i32, i32
  }
  func.func @transform_2(%arg0: i32, %arg1: i32, %arg2: i32) -> (i32, i32) {
    %c0_i32 = arith.constant 0 : i32
    %c0_i32_0 = arith.constant 0 : i32
    return %arg1, %c0_i32 : i32, i32
  }
  func.func @transform_3(%arg0: i32, %arg1: i32, %arg2: i32) -> (i32, i32, i32) {
    %c0_i32 = arith.constant 0 : i32
    %c0_i32_0 = arith.constant 0 : i32
    return %c0_i32, %arg1, %arg0 : i32, i32, i32
  }
}

</mosaic_0001>

<llo_original>
// kernel: tpu_custom_call.1
$region0: #{tpu_custom_call.1}
  #allocation0 [shape = 'u32[]', space=smem, size = 0x4, offset = 0x4, fixed_abs, tag = 'smem constant byte address 0x4 - core index']
  #allocation1 [shape = 'u32[144,128]{1,0:T(1,128)}', space=vmem, size = 0x12000, scoped, tag = 'internal scratch']
  %s0 = inlined_call_operand.vmem [shape: f32[1,4,32], index: 0, kind: input, shape index: {}]
  %s1 = inlined_call_operand.vmem [shape: f32[8,4], index: 1, kind: input, shape index: {}]
  %s2 = inlined_call_operand.vmem [shape: f32[8,1], index: 2, kind: input, shape index: {}]
  %s3 = inlined_call_operand.hbm [shape: f32[1,8,32], index: 3, kind: output, shape index: {}]
  %s4 = sld [smem:[#allocation0]]
  $region22: #{tpu_custom_call.1} parent=0
    _
  %s6 = ssub.s32 1, %s4
  %s7 = scalar_select 0, %s6, %s4
  $region1: #{tpu_custom_call.1} parent=0
    #allocation2 [shape = 'u8[4096]{0}', space=vmem, size = 0x1000, scoped, tag = 'output window, operand 0, single buffered']
    #allocation3 [shape = 's32[1]{0}', space=sflag, size = 0x4, scoped, tag = 'scoped memory for tpu_custom_call.1']
    %8 = vsyncpa [#allocation3], 0
    // Predicated region
    $region2: #{tpu_custom_call.1} parent=1 // pred_check
      _
    $region3: #{tpu_custom_call.1} parent=1 // pred_check_branch
      %10 = sbr.rel (0) target = $region5
    $region4: #{tpu_custom_call.1} parent=1 // pred_region
      _
    $region5: #{tpu_custom_call.1} parent=1 // pred_fallthru
      _
    // Predicated region
    $region6: #{tpu_custom_call.1} parent=1 // pred_check
      _
    $region7: #{tpu_custom_call.1} parent=1 // pred_check_branch
      %12 = sbr.rel (0) target = $region9
    $region8: #{tpu_custom_call.1} parent=1 // pred_region
      _
    $region9: #{tpu_custom_call.1} parent=1 // pred_fallthru
      _
    // Predicated region
    $region10: #{tpu_custom_call.1} parent=1 // pred_check
      _
    $region11: #{tpu_custom_call.1} parent=1 // pred_check_branch
      %14 = sbr.rel (0) target = $region13
    $region12: #{tpu_custom_call.1} parent=1 // pred_region
      _
    $region13: #{tpu_custom_call.1} parent=1 // pred_fallthru
      _
    %v15 = vld [vmem:[%s0] sm:$0xf]
    %v16 = vld [vmem:[%s1] sm:$0xff]
    %v17 = vld [vmem:[%s2] sm:$0xff]
    %19 = vset.pattern.permute.xlu0 0
    %20 = vperm.xlu0 %19, %v17
    %v21 = vpop.permute.xlu0 %20
    %vm23 = vcmask 31744
    %v25 = vsel %vm23, %v16, 0
    %vm27 = vcmask 1043456
    %v29 = vsel %vm27, %v15, 0
    %31 = vmatprep.subr.mxu0 0.0
    %32 = vmatpush1.msra.mxu0 0.0
    %33 = vmatprep.subr.mxu0 0.0
    %34 = vmatpush1.msra.mxu0 0.0
    %35 = vmatprep.subr.mxu0 0.0
    %36 = vmatpush1.msra.mxu0 0.0
    %37 = vmatprep.subr.mxu0 0.0
    %38 = vmatpush1.msra.mxu0 0.0
    %39 = vmatprep.subr.mxu0 0.0
    %40 = vmatpush1.msra.mxu0 0.0
    %41 = vmatprep.subr.mxu0 0.0
    %42 = vmatpush1.msra.mxu0 0.0
    %43 = vmatprep.subr.mxu0 0.0
    %44 = vmatpush1.msra.mxu0 0.0
    %45 = vmatprep.subr.mxu0 0.0
    %46 = vmatpush1.msra.mxu0 0.0
    %47 = vmatprep.subr.mxu0 0.0
    %48 = vmatpush1.msra.mxu0 0.0
    %49 = vmatprep.subr.mxu0 0.0
    %50 = vmatpush1.msra.mxu0 0.0
    %51 = vmatprep.subr.mxu0 0.0
    %52 = vmatpush1.msra.mxu0 0.0
    %53 = vmatprep.subr.mxu0 0.0
    %54 = vmatpush1.msra.mxu0 0.0
    %55 = vmatprep.subr.mxu0 0.0
    %56 = vmatpush1.msra.mxu0 0.0
    %57 = vmatprep.subr.mxu0 0.0
    %58 = vmatpush1.msra.mxu0 0.0
    %59 = vmatprep.subr.mxu0 0.0
    %60 = vmatpush1.msra.mxu0 0.0
    %61 = vmatprep.subr.mxu0 0.0
    %62 = vmatpush1.msra.mxu0 %v29
    %63 = vmatprep.subr.mxu0 0.0
    %64 = vmatpush2.msra.mxu0 0.0
    %65 = vmatprep.subr.mxu0 0.0
    %66 = vmatpush2.msra.mxu0 0.0
    %67 = vmatprep.subr.mxu0 0.0
    %68 = vmatpush2.msra.mxu0 0.0
    %69 = vmatprep.subr.mxu0 0.0
    %70 = vmatpush2.msra.mxu0 0.0
    %71 = vmatprep.subr.mxu0 0.0
    %72 = vmatpush2.msra.mxu0 0.0
    %73 = vmatprep.subr.mxu0 0.0
    %74 = vmatpush2.msra.mxu0 0.0
    %75 = vmatprep.subr.mxu0 0.0
    %76 = vmatpush2.msra.mxu0 0.0
    %77 = vmatprep.subr.mxu0 0.0
    %78 = vmatpush2.msra.mxu0 0.0
    %79 = vmatprep.subr.mxu0 0.0
    %80 = vmatpush2.msra.mxu0 0.0
    %81 = vmatprep.subr.mxu0 0.0
    %82 = vmatpush2.msra.mxu0 0.0
    %83 = vmatprep.subr.mxu0 0.0
    %84 = vmatpush2.msra.mxu0 0.0
    %85 = vmatprep.subr.mxu0 0.0
    %86 = vmatpush2.msra.mxu0 0.0
    %87 = vmatprep.subr.mxu0 0.0
    %88 = vmatpush2.msra.mxu0 0.0
    %89 = vmatprep.subr.mxu0 0.0
    %90 = vmatpush2.msra.mxu0 0.0
    %91 = vmatprep.subr.mxu0 0.0
    %92 = vmatpush2.msra.mxu0 0.0
    %93 = vmatprep.subr.mxu0 0.0
    %94 = vmatpush2.msra.mxu0 0.0
    %95 = vmatprep.mubr.f32.mxu0 0.0
    %96 = vmatmul.mubr.f32.gmra.mxu0 %v25
    %v97 = vpop.f32.mrf.mxu0
    %v98 = vadd.f32 %v21, %v97
    %v99 = vpop.f32.mrf.mxu0
    %100 = vdwg.mxu0
    %vm101 = vcmask 261120
    %102 = vst.msk [vmem:[#allocation2] sm:$0xff] %vm101, %v98
    // Predicated region
    $region14: #{tpu_custom_call.1} parent=1 // pred_check
      _
    $region15: #{tpu_custom_call.1} parent=1 // pred_check_branch
      %104 = sbr.rel (0) target = $region17
    $region16: #{tpu_custom_call.1} parent=1 // pred_region
      %s106 = ssub.s32 128, 128
      %107 = vsyncadd [#allocation3], %s106
      %s109 = sshll.u32 [#allocation2], 4
      %s110 = int_to_ptr.vmem [resolvable:$true] %s109
      %112 = dma.vmem_to_hbm [thread:$0]  %s110, 128, %s3, [#allocation3]
    $region17: #{tpu_custom_call.1} parent=1 // pred_fallthru
      _
    // Predicated region
    $region18: #{tpu_custom_call.1} parent=1 // pred_check
      _
    $region19: #{tpu_custom_call.1} parent=1 // pred_check_branch
      %114 = sbr.rel (0) target = $region21
    $region20: #{tpu_custom_call.1} parent=1 // pred_region
      %115 = dma.done [#allocation3], 128
    $region21: #{tpu_custom_call.1} parent=1 // pred_fallthru
      _
    %116 = vsyncpa [#allocation3], 1

</llo_original>
